<compile_context>
chip_gen: v7x
topology: tpu7x:2x2x1
jax: 0.10.0
libtpu: 0.0.40
codegen_flags: <defaults>
</compile_context>

<pallas_src>
from math import ceil

import numpy as np
import jax
import jax.numpy as jnp
from jax.experimental import pallas as pl
from jax.experimental.pallas import tpu as pltpu

_LANE = 128


def _exclusive_prefix_sum_rows(v):
    """Exclusive prefix sum along axis 0 via Hillis-Steele shift-adds.

    O(S log S) adds on [S, L] tiles; negligible next to the O(pr*S) rank loop.
    Uses only static slices + concatenate (always lower in Mosaic).
    """
    s = v.shape[0]
    acc = v
    shift = 1
    while shift < s:
        zeros = jnp.zeros((shift,) + v.shape[1:], v.dtype)
        acc = acc + jnp.concatenate([zeros, acc[: s - shift]], axis=0)
        shift *= 2
    return acc - v


def _dynamic_kmax_kernel(prmax_ref, ptmax_ref, pr_ref, pt_ref, x_ref, o_ref,
                         rank_ref):
    """One grid step == one block of 128 lanes (= 128 (sample, feature) cols).

    prmax_ref / ptmax_ref : SMEM int32[n_blocks]  per-block max pool_range /
                            max pool_target (dynamic loop bounds).
    pr_ref / pt_ref       : VMEM int32[1, 128]    per-lane pool_range / target.
    x_ref                 : VMEM f32[S, 128]
    o_ref                 : VMEM f32[K, 128]      K = max pool_target in batch.
    rank_ref              : VMEM int32[S, 128]    scratch accumulator.
    """
    g = pl.program_id(0)
    pr_max = prmax_ref[g]
    pt_max = ptmax_ref[g]

    x = x_ref[...].astype(jnp.float32)          # [S, L]  (keep math in f32)
    S, L = x.shape
    K = o_ref.shape[0]

    pr_l = pr_ref[...]                          # [1, L]
    pt_l = pt_ref[...]                          # [1, L]

    row = jax.lax.broadcasted_iota(jnp.int32, (S, L), 0)   # hoisted, reused
    valid = row < pr_l                          # [S, L]
    neg_inf = jnp.float32(-jnp.inf)
    xm = jnp.where(valid, x, neg_inf)

    # --- rank: #rows beating row i (value desc, earlier-index tie-break) -----
    # Loop over j with an [S, L] accumulator instead of an [S, S, D] tensor;
    # bounded by this block's max pool_range, not S.
    rank_ref[...] = jnp.zeros((S, L), jnp.int32)

    @pl.loop(0, pr_max)
    def _(j):
        xj = x_ref[pl.ds(j, 1), :].astype(jnp.float32)        # [1, L]
        xj = jnp.where(j < pr_l, xj, neg_inf)                 # per-lane validity of row j
        beats = (xj > xm) | ((xj == xm) & (j < row))
        rank_ref[...] += beats.astype(jnp.int32)

    # --- selection + compacted destination row (original order kept) --------
    sel = valid & (rank_ref[...] < pt_l)                      # [S, L]
    pos = _exclusive_prefix_sum_rows(sel.astype(jnp.int32))   # [S, L]

    # --- order-preserving compaction; rows >= pool_target stay zero ---------
    o_ref[...] = jnp.zeros((K, L), o_ref.dtype)

    @pl.loop(0, pt_max)
    def _(r):
        keep = sel & (pos == r)
        o_ref[pl.ds(r, 1), :] = jnp.sum(
            jnp.where(keep, x, jnp.float32(0.0)), axis=0, keepdims=True
        ).astype(o_ref.dtype)


def dynamic_max_pool(x, lengths, layer, total_layers, pool_ranges, top_k):
    """JAX/Pallas port of DynamicMaxPool.forward.

    x            : f32[B, S, D]
    lengths      : list[int] (static)
    pool_ranges  : list[int] (static), pool_ranges[i] >= pool_target[i]
    returns      : (f32[B, K, D], list[int] pool_result_ranges)
    """
    B, S, D = x.shape
    pool_targets = [
        max(top_k, ceil((total_layers - layer) / total_layers * int(l)))
        for l in lengths
    ]
    K = max(pool_targets)

    # Fold batch into lanes (lane = b*D + d); pad lane dim to a multiple of 128
    # so every vector op uses all 128 lanes even when D < 128.
    BD = B * D
    BD_pad = ((BD + _LANE - 1) // _LANE) * _LANE
    n_blocks = BD_pad // _LANE

    x2 = jnp.transpose(x, (1, 0, 2)).reshape(S, BD)
    if BD_pad != BD:
        x2 = jnp.pad(x2, ((0, 0), (0, BD_pad - BD)))

    pr_np = np.zeros((BD_pad,), np.int32)     # padded lanes: pr = pt = 0 -> all-zero output
    pt_np = np.zeros((BD_pad,), np.int32)
    for b in range(B):
        pr_np[b * D:(b + 1) * D] = int(pool_ranges[b])
        pt_np[b * D:(b + 1) * D] = int(pool_targets[b])

    # Per-lane-block dynamic loop bounds (static Python metadata -> SMEM).
    prmax_np = pr_np.reshape(n_blocks, _LANE).max(axis=1).astype(np.int32)
    ptmax_np = pt_np.reshape(n_blocks, _LANE).max(axis=1).astype(np.int32)

    pr2 = jnp.asarray(pr_np).reshape(1, BD_pad)
    pt2 = jnp.asarray(pt_np).reshape(1, BD_pad)
    prmax = jnp.asarray(prmax_np)
    ptmax = jnp.asarray(ptmax_np)

    out2 = pl.pallas_call(
        _dynamic_kmax_kernel,
        out_shape=jax.ShapeDtypeStruct((K, BD_pad), x.dtype),
        grid_spec=pltpu.PrefetchScalarGridSpec(
            num_scalar_prefetch=2,
            grid=(n_blocks,),
            in_specs=[
                pl.BlockSpec((1, _LANE), lambda g, prm, ptm: (0, g)),   # pool_range per lane
                pl.BlockSpec((1, _LANE), lambda g, prm, ptm: (0, g)),   # pool_target per lane
                pl.BlockSpec((S, _LANE), lambda g, prm, ptm: (0, g)),   # x tile
            ],
            out_specs=pl.BlockSpec((K, _LANE), lambda g, prm, ptm: (0, g)),
            scratch_shapes=[pltpu.VMEM((S, _LANE), jnp.int32)],
        ),
        compiler_params=pltpu.CompilerParams(
            dimension_semantics=("parallel",),   # lane blocks independent -> megacore/2-TC sharding
        ),
    )(prmax, ptmax, pr2, pt2, x2)

    out = jnp.transpose(out2[:, :BD].reshape(K, B, D), (1, 0, 2))
    return out, pool_targets


if __name__ == "__main__":
    key = jax.random.PRNGKey(0)
    B, S, D = 2, 16, 32
    top_k = 3
    layer, total_layers = 1, 4
    lengths = [16, 10]
    pool_ranges = [16, 10]

    x = jax.random.normal(key, (B, S, D), dtype=jnp.float32)

    out, pool_result_ranges = dynamic_max_pool(
        x, lengths, layer, total_layers, pool_ranges, top_k
    )
    out = jax.block_until_ready(out)

    # numpy reference (mirrors kmax_pooling + pad_sequence semantics)
    xn = np.asarray(x)
    K = out.shape[1]
    ref = np.zeros((B, K, D), dtype=np.float32)
    for bi in range(B):
        s = xn[bi, : pool_ranges[bi]]
        k = pool_result_ranges[bi]
        for d in range(D):
            col = s[:, d]
            idx = np.sort(np.argsort(-col, kind="stable")[:k])
            ref[bi, :k, d] = col[idx]

    assert np.allclose(np.asarray(out), ref, atol=1e-6), "mismatch vs reference"
    print("KERNEL_OK")
</pallas_src>

<mosaic_0001>
module attributes {stable_mosaic.version = 11 : i64} {
  func.func @_dynamic_kmax_kernel(%arg0: i32, %arg1: memref<1xi32, #tpu.memory_space<smem>>, %arg2: memref<1xi32, #tpu.memory_space<smem>>, %arg3: memref<1x128xi32, #tpu.memory_space<vmem>>, %arg4: memref<1x128xi32, #tpu.memory_space<vmem>>, %arg5: memref<16x128xf32, #tpu.memory_space<vmem>>, %arg6: memref<12x128xf32, #tpu.memory_space<vmem>>, %arg7: memref<16x128xi32, #tpu.memory_space<vmem>>) attributes {dimension_semantics = [#tpu.dimension_semantics<parallel>], iteration_bounds = array<i64: 1>, scalar_prefetch = 2 : i64, scratch_operands = 1 : i64, tpu.core_type = #tpu.core_type<tc>, window_params = [{transform_indices = @transform_0, window_bounds = array<i64: 1, 128>}, {transform_indices = @transform_1, window_bounds = array<i64: 1, 128>}, {transform_indices = @transform_2, window_bounds = array<i64: 16, 128>}, {transform_indices = @transform_3, window_bounds = array<i64: 12, 128>}]} {
    %0 = arith.index_cast %arg0 : i32 to index
    %1 = memref.load %arg1[%0] : memref<1xi32, #tpu.memory_space<smem>>
    %2 = arith.index_cast %arg0 : i32 to index
    %3 = memref.load %arg2[%2] : memref<1xi32, #tpu.memory_space<smem>>
    %c0 = arith.constant 0 : index
    %c0_0 = arith.constant 0 : index
    %4 = vector.load %arg5[%c0, %c0_0] : memref<16x128xf32, #tpu.memory_space<vmem>>, vector<16x128xf32>
    %c0_1 = arith.constant 0 : index
    %c0_2 = arith.constant 0 : index
    %5 = vector.load %arg3[%c0_1, %c0_2] : memref<1x128xi32, #tpu.memory_space<vmem>>, vector<1x128xi32>
    %c0_3 = arith.constant 0 : index
    %c0_4 = arith.constant 0 : index
    %6 = vector.load %arg4[%c0_3, %c0_4] : memref<1x128xi32, #tpu.memory_space<vmem>>, vector<1x128xi32>
    %7 = tpu.iota {dimensions = array<i32: 0>} : vector<16x128xi32>
    %8 = vector.broadcast %5 : vector<1x128xi32> to vector<16x128xi32>
    %9 = arith.cmpi slt, %7, %8 : vector<16x128xi32>
    %cst = arith.constant 0xFF800000 : f32
    %10 = vector.broadcast %cst : f32 to vector<16x128xf32>
    %11 = arith.select %9, %4, %10 : vector<16x128xi1>, vector<16x128xf32>
    %c0_i32 = arith.constant 0 : i32
    %12 = vector.broadcast %c0_i32 : i32 to vector<16x128xi32>
    %c0_5 = arith.constant 0 : index
    %c0_6 = arith.constant 0 : index
    %13 = vector.load %arg7[%c0_5, %c0_6] : memref<16x128xi32, #tpu.memory_space<vmem>>, vector<16x128xi32>
    tpu.vector_store %arg7[%c0_5, %c0_6], %12 {strides = array<i32>} : memref<16x128xi32, #tpu.memory_space<vmem>>, vector<16x128xi32>,
    %c0_i32_7 = arith.constant 0 : i32
    %14 = arith.subi %1, %c0_i32_7 : i32
    %c1_i32 = arith.constant 1 : i32
    %c1_i32_8 = arith.constant 1 : i32
    %15 = arith.subi %c1_i32, %c1_i32_8 : i32
    %16 = arith.addi %14, %15 : i32
    %c1_i32_9 = arith.constant 1 : i32
    %17 = arith.divsi %16, %c1_i32_9 : i32
    %c1_i32_10 = arith.constant 1 : i32
    %c0_i32_11 = arith.constant 0 : i32
    %cst_12 = arith.constant 0xFF800000 : f32
    %c0_i32_13 = arith.constant 0 : i32
    %18 = arith.subi %17, %c0_i32_13 : i32
    %19 = arith.addi %c0_i32_13, %18 : i32
    %c1_i32_14 = arith.constant 1 : i32
    scf.for %arg8 = %c0_i32_13 to %19 step %c1_i32_14  : i32 {
      %50 = arith.muli %arg8, %c1_i32_10 : i32
      %51 = arith.addi %c0_i32_11, %50 : i32
      %52 = arith.index_cast %51 : i32 to index
      %c0_32 = arith.constant 0 : index
      %53 = vector.load %arg5[%52, %c0_32] : memref<16x128xf32, #tpu.memory_space<vmem>>, vector<1x128xf32>
      %54 = vector.broadcast %51 : i32 to vector<1x128xi32>
      %55 = arith.cmpi slt, %54, %5 : vector<1x128xi32>
      %56 = vector.broadcast %cst_12 : f32 to vector<1x128xf32>
      %57 = arith.select %55, %53, %56 : vector<1x128xi1>, vector<1x128xf32>
      %58 = vector.broadcast %57 : vector<1x128xf32> to vector<16x128xf32>
      %59 = arith.cmpf ogt, %58, %11 : vector<16x128xf32>
      %60 = vector.broadcast %57 : vector<1x128xf32> to vector<16x128xf32>
      %61 = arith.cmpf oeq, %60, %11 : vector<16x128xf32>
      %62 = vector.broadcast %51 : i32 to vector<16x128xi32>
      %63 = arith.cmpi slt, %62, %7 : vector<16x128xi32>
      %64 = arith.andi %61, %63 : vector<16x128xi1>
      %65 = arith.ori %59, %64 : vector<16x128xi1>
      %c0_33 = arith.constant 0 : index
      %c0_34 = arith.constant 0 : index
      %66 = vector.load %arg7[%c0_33, %c0_34] : memref<16x128xi32, #tpu.memory_space<vmem>>, vector<16x128xi32>
      %67 = arith.extui %65 : vector<16x128xi1> to vector<16x128xi32>
      %68 = arith.addi %66, %67 : vector<16x128xi32>
      %c0_35 = arith.constant 0 : index
      %c0_36 = arith.constant 0 : index
      %69 = vector.load %arg7[%c0_35, %c0_36] : memref<16x128xi32, #tpu.memory_space<vmem>>, vector<16x128xi32>
      tpu.vector_store %arg7[%c0_35, %c0_36], %68 {strides = array<i32>} : memref<16x128xi32, #tpu.memory_space<vmem>>, vector<16x128xi32>,
    }
    %c0_15 = arith.constant 0 : index
    %c0_16 = arith.constant 0 : index
    %20 = vector.load %arg7[%c0_15, %c0_16] : memref<16x128xi32, #tpu.memory_space<vmem>>, vector<16x128xi32>
    %21 = vector.broadcast %6 : vector<1x128xi32> to vector<16x128xi32>
    %22 = arith.cmpi slt, %20, %21 : vector<16x128xi32>
    %23 = arith.andi %9, %22 : vector<16x128xi1>
    %24 = arith.extui %23 : vector<16x128xi1> to vector<16x128xi32>
    %c0_i32_17 = arith.constant 0 : i32
    %25 = vector.broadcast %c0_i32_17 : i32 to vector<1x128xi32>
    %26 = vector.extract_strided_slice %24 {offsets = [0, 0], sizes = [15, 128], strides = [1, 1]} : vector<16x128xi32> to vector<15x128xi32>
    %27 = tpu.concatenate %25, %26 in 0 : vector<1x128xi32>, vector<15x128xi32> -> vector<16x128xi32>
    %28 = arith.addi %24, %27 : vector<16x128xi32>
    %c0_i32_18 = arith.constant 0 : i32
    %29 = vector.broadcast %c0_i32_18 : i32 to vector<2x128xi32>
    %30 = vector.extract_strided_slice %28 {offsets = [0, 0], sizes = [14, 128], strides = [1, 1]} : vector<16x128xi32> to vector<14x128xi32>
    %31 = tpu.concatenate %29, %30 in 0 : vector<2x128xi32>, vector<14x128xi32> -> vector<16x128xi32>
    %32 = arith.addi %28, %31 : vector<16x128xi32>
    %c0_i32_19 = arith.constant 0 : i32
    %33 = vector.broadcast %c0_i32_19 : i32 to vector<4x128xi32>
    %34 = vector.extract_strided_slice %32 {offsets = [0, 0], sizes = [12, 128], strides = [1, 1]} : vector<16x128xi32> to vector<12x128xi32>
    %35 = tpu.concatenate %33, %34 in 0 : vector<4x128xi32>, vector<12x128xi32> -> vector<16x128xi32>
    %36 = arith.addi %32, %35 : vector<16x128xi32>
    %c0_i32_20 = arith.constant 0 : i32
    %37 = vector.broadcast %c0_i32_20 : i32 to vector<8x128xi32>
    %38 = vector.extract_strided_slice %36 {offsets = [0, 0], sizes = [8, 128], strides = [1, 1]} : vector<16x128xi32> to vector<8x128xi32>
    %39 = tpu.concatenate %37, %38 in 0 : vector<8x128xi32>, vector<8x128xi32> -> vector<16x128xi32>
    %40 = arith.addi %36, %39 : vector<16x128xi32>
    %41 = arith.subi %40, %24 : vector<16x128xi32>
    %cst_21 = arith.constant 0.000000e+00 : f32
    %42 = vector.broadcast %cst_21 : f32 to vector<12x128xf32>
    %c0_22 = arith.constant 0 : index
    %c0_23 = arith.constant 0 : index
    %43 = vector.load %arg6[%c0_22, %c0_23] : memref<12x128xf32, #tpu.memory_space<vmem>>, vector<12x128xf32>
    tpu.vector_store %arg6[%c0_22, %c0_23], %42 {strides = array<i32>} : memref<12x128xf32, #tpu.memory_space<vmem>>, vector<12x128xf32>,
    %c0_i32_24 = arith.constant 0 : i32
    %44 = arith.subi %3, %c0_i32_24 : i32
    %c1_i32_25 = arith.constant 1 : i32
    %c1_i32_26 = arith.constant 1 : i32
    %45 = arith.subi %c1_i32_25, %c1_i32_26 : i32
    %46 = arith.addi %44, %45 : i32
    %c1_i32_27 = arith.constant 1 : i32
    %47 = arith.divsi %46, %c1_i32_27 : i32
    %c1_i32_28 = arith.constant 1 : i32
    %c0_i32_29 = arith.constant 0 : i32
    %c0_i32_30 = arith.constant 0 : i32
    %48 = arith.subi %47, %c0_i32_30 : i32
    %49 = arith.addi %c0_i32_30, %48 : i32
    %c1_i32_31 = arith.constant 1 : i32
    scf.for %arg8 = %c0_i32_30 to %49 step %c1_i32_31  : i32 {
      %50 = arith.muli %arg8, %c1_i32_28 : i32
      %51 = arith.addi %c0_i32_29, %50 : i32
      %52 = vector.broadcast %51 : i32 to vector<16x128xi32>
      %53 = arith.cmpi eq, %41, %52 : vector<16x128xi32>
      %54 = arith.andi %23, %53 : vector<16x128xi1>
      %cst_32 = arith.constant 0.000000e+00 : f32
      %55 = vector.broadcast %cst_32 : f32 to vector<16x128xf32>
      %56 = arith.select %54, %4, %55 : vector<16x128xi1>, vector<16x128xf32>
      %cst_33 = arith.constant dense<0.000000e+00> : vector<128xf32>
      %57 = vector.multi_reduction <add>, %56, %cst_33 [0] : vector<16x128xf32> to vector<128xf32>
      %58 = vector.shape_cast %57 : vector<128xf32> to vector<1x128xf32>
      %59 = arith.index_cast %51 : i32 to index
      %c0_34 = arith.constant 0 : index
      %60 = vector.load %arg6[%59, %c0_34] : memref<12x128xf32, #tpu.memory_space<vmem>>, vector<1x128xf32>
      tpu.vector_store %arg6[%59, %c0_34], %58 {strides = array<i32>} : memref<12x128xf32, #tpu.memory_space<vmem>>, vector<1x128xf32>,
    }
    return
  }
  func.func @transform_0(%arg0: i32, %arg1: memref<1xi32, #tpu.memory_space<smem>>, %arg2: memref<1xi32, #tpu.memory_space<smem>>) -> (i32, i32) {
    %c0_i32 = arith.constant 0 : i32
    %c0_i32_0 = arith.constant 0 : i32
    return %c0_i32, %arg0 : i32, i32
  }
  func.func @transform_1(%arg0: i32, %arg1: memref<1xi32, #tpu.memory_space<smem>>, %arg2: memref<1xi32, #tpu.memory_space<smem>>) -> (i32, i32) {
    %c0_i32 = arith.constant 0 : i32
    %c0_i32_0 = arith.constant 0 : i32
    return %c0_i32, %arg0 : i32, i32
  }
  func.func @transform_2(%arg0: i32, %arg1: memref<1xi32, #tpu.memory_space<smem>>, %arg2: memref<1xi32, #tpu.memory_space<smem>>) -> (i32, i32) {
    %c0_i32 = arith.constant 0 : i32
    %c0_i32_0 = arith.constant 0 : i32
    return %c0_i32, %arg0 : i32, i32
  }
  func.func @transform_3(%arg0: i32, %arg1: memref<1xi32, #tpu.memory_space<smem>>, %arg2: memref<1xi32, #tpu.memory_space<smem>>) -> (i32, i32) {
    %c0_i32 = arith.constant 0 : i32
    %c0_i32_0 = arith.constant 0 : i32
    return %c0_i32, %arg0 : i32, i32
  }
}

</mosaic_0001>

<llo_original>
// kernel: tpu_custom_call.1
$region0: #{tpu_custom_call.1}
  #allocation0 [shape = 'u32[]', space=smem, size = 0x4, offset = 0x4, fixed_abs, tag = 'smem constant byte address 0x4 - core index']
  #allocation1 [shape = 'u32[144,128]{1,0:T(1,128)}', space=vmem, size = 0x12000, scoped, tag = 'internal scratch']
  #allocation2 [shape = 's32[16,128]{1,0:T(8,128)}', space=vmem, size = 0x2000, scoped, tag = 'scratch operand']
  #allocation3 [shape = 's32[1]{0}', space=sflag, size = 0x4, scoped, tag = 'scoped memory for tpu_custom_call.1']
  #allocation4 [shape = 's32[1]{0:T(128)S(6)}', space=smem, size = 0x200, scoped, tag = 'prefetched SMEM operand 0']
  #allocation5 [shape = 's32[1]{0:T(128)S(6)}', space=smem, size = 0x200, scoped, tag = 'prefetched SMEM operand 1']
  %s0 = inlined_call_operand.<no memory space> [shape: s32[1], index: 0, kind: input, shape index: {}]
  %s1 = inlined_call_operand.<no memory space> [shape: s32[1], index: 1, kind: input, shape index: {}]
  %s2 = inlined_call_operand.vmem [shape: s32[1,128], index: 2, kind: input, shape index: {}]
  %s3 = inlined_call_operand.vmem [shape: s32[1,128], index: 3, kind: input, shape index: {}]
  %s4 = inlined_call_operand.hbm [shape: f32[16,128], index: 4, kind: input, shape index: {}]
  %s5 = inlined_call_operand.hbm [shape: f32[12,128], index: 5, kind: output, shape index: {}]
  %s6 = sld [smem:[#allocation0]]
  $region40: #{tpu_custom_call.1} parent=0
    _
  %s8 = ssub.s32 1, %s6
  %s9 = scalar_select 0, %s8, %s6
  %10 = sst [smem:[#allocation4]] %s0
  %11 = sst [smem:[#allocation5]] %s1
  $region1: #{tpu_custom_call.1} parent=0
    #allocation6 [shape = 'u8[8192]{0}', space=vmem, size = 0x2000, scoped, tag = 'input window, operand 4, single buffered']
    #allocation7 [shape = 's32[1]{0}', space=sflag, size = 0x4, scoped, tag = 'scoped memory for tpu_custom_call.1']
    #allocation8 [shape = 's32[1]{0}', space=sflag, size = 0x4, scoped, tag = 'scoped memory for tpu_custom_call.1']
    #allocation9 [shape = 'u8[8192]{0}', space=vmem, size = 0x2000, scoped, tag = 'output window, operand 0, single buffered']
    %12 = vsyncpa [#allocation7], 0
    %13 = vsyncpa [#allocation8], 0
    // Predicated region
    $region2: #{tpu_custom_call.1} parent=1 // pred_check
      _
    $region3: #{tpu_custom_call.1} parent=1 // pred_check_branch
      %15 = sbr.rel (0) target = $region5
    $region4: #{tpu_custom_call.1} parent=1 // pred_region
      _
    $region5: #{tpu_custom_call.1} parent=1 // pred_fallthru
      _
    // Predicated region
    $region6: #{tpu_custom_call.1} parent=1 // pred_check
      _
    $region7: #{tpu_custom_call.1} parent=1 // pred_check_branch
      %17 = sbr.rel (0) target = $region9
    $region8: #{tpu_custom_call.1} parent=1 // pred_region
      _
    $region9: #{tpu_custom_call.1} parent=1 // pred_fallthru
      _
    // Predicated region
    $region10: #{tpu_custom_call.1} parent=1 // pred_check
      _
    $region11: #{tpu_custom_call.1} parent=1 // pred_check_branch
      %19 = sbr.rel (0) target = $region13
    $region12: #{tpu_custom_call.1} parent=1 // pred_region
      %s21 = ssub.s32 256, 256
      %22 = vsyncadd [#allocation7], %s21
      %s23 = sshll.u32 [#allocation6], 4
      %s24 = int_to_ptr.vmem [resolvable:$true] %s23
      %29 = dma.hbm_to_vmem [thread:$0]  %s4, 256, %s24, [#allocation7], 128, 128, 8
    $region13: #{tpu_custom_call.1} parent=1 // pred_fallthru
      _
    // Predicated region
    $region14: #{tpu_custom_call.1} parent=1 // pred_check
      _
    $region15: #{tpu_custom_call.1} parent=1 // pred_check_branch
      %31 = sbr.rel (0) target = $region17
    $region16: #{tpu_custom_call.1} parent=1 // pred_region
      %32 = dma.done [#allocation7], 256
    $region17: #{tpu_custom_call.1} parent=1 // pred_fallthru
      _
    %s33 = sld [smem:[#allocation4]]
    %s34 = sld [smem:[#allocation5]]
    %v35 = vld [vmem:[#allocation6] sm:$0xff]
    %v36 = vld [vmem:[#allocation6 + $0x8] sm:$0xff]
    %v37 = vld [vmem:[%s2] sm:$0x1]
    %v38 = vld [vmem:[%s3] sm:$0x1]
    %v39 = vlaneseq
    %v40 = vshrl.u32 %v39, 7
    %v41 = vadd.s32 %v40, 8
    %v42 = vlaneseq
    %v43 = vshrl.u32 %v42, 7
    %v44 = vsub.s32 0, %v43
    %v45 = vrot.slane %v37, %v44
    %vm46 = vcmp.lt.s32.totalorder %v40, %v45
    %vm47 = vcmp.lt.s32.totalorder %v41, %v45
    %v48 = vsel %vm46, %v35, -inf
    %v49 = vsel %vm47, %v36, -inf
    %50 = vst [vmem:[#allocation2] sm:$0xff] 0
    %51 = vst [vmem:[#allocation2 + $0x8] sm:$0xff] 0
    // While loop
    $region18: #{tpu_custom_call.1} parent=1 // loop_pre_header
      _
    $region19: #{tpu_custom_call.1} parent=1 // loop_header
      %s53 = sphi 0, %s55
      %p54 = scmp.ge.s32.totalorder %s53, %s33
    $region20: #{tpu_custom_call.1} parent=1 // loop_header_branch
      %57 = sbr.rel (%p54) target = $region24
    $region21: #{tpu_custom_call.1} parent=1 // loop_body
      %s58 = scalar_lea.vmem [#allocation6], %s53
      %v59 = vld [vmem:[%s58] sm:$0x1]
      %v60 = vstv %s53
      %vm61 = vcmp.lt.s32.totalorder %v60, %v37
      %v62 = vsel %vm61, %v59, -inf
      %v64 = vlaneseq
      %v65 = vshrl.u32 %v64, 7
      %v66 = vsub.s32 0, %v65
      %v67 = vrot.slane %v62, %v66
      %vm69 = vcmp.gt.f32.partialorder %v67, %v48
      %vm70 = vcmp.gt.f32.partialorder %v67, %v49
      %vm71 = vcmp.eq.f32.partialorder %v67, %v48
      %vm72 = vcmp.eq.f32.partialorder %v67, %v49
      %vm73 = vcmp.lt.s32.totalorder %v60, %v40
      %vm74 = vcmp.lt.s32.totalorder %v60, %v41
      %vm75 = vmand %vm71, %vm73
      %vm76 = vmand %vm72, %vm74
      %vm77 = vmor %vm69, %vm75
      %vm78 = vmor %vm70, %vm76
      %v79 = vld [vmem:[#allocation2] sm:$0xff]
      %v80 = vld [vmem:[#allocation2 + $0x8] sm:$0xff]
      %v81 = vsel %vm77, 1, 0
      %v82 = vsel %vm78, 1, 0
      %v83 = vadd.s32 %v79, %v81
      %v84 = vadd.s32 %v80, %v82
      %85 = vst [vmem:[#allocation2] sm:$0xff] %v83
      %86 = vst [vmem:[#allocation2 + $0x8] sm:$0xff] %v84
    $region22: #{tpu_custom_call.1} parent=1 // loop_footer
      %s55 = sadd.s32 %s53, 1
    $region23: #{tpu_custom_call.1} parent=1 // loop_footer_branch
      %52 = sbr.rel target = $region19
    $region24: #{tpu_custom_call.1} parent=1 // loop_exit
      _
    %v87 = vld [vmem:[#allocation2] sm:$0xff]
    %v88 = vld [vmem:[#allocation2 + $0x8] sm:$0xff]
    %v89 = vlaneseq
    %v90 = vshrl.u32 %v89, 7
    %v91 = vsub.s32 0, %v90
    %v92 = vrot.slane %v38, %v91
    %vm93 = vcmp.lt.s32.totalorder %v87, %v92
    %vm94 = vcmp.lt.s32.totalorder %v88, %v92
    %vm95 = vmand %vm46, %vm93
    %vm96 = vmand %vm47, %vm94
    %v97 = vsel %vm95, 1, 0
    %v98 = vsel %vm96, 1, 0
    %vm99 = vcmask 1040384
    %v100 = vrot.slane %v97, 7
    %v101 = vrot.slane %v98, 7
    %v102 = vsel %vm99, %v100, %v101
    %v103 = vsel %vm99, 0, %v100
    %v104 = vadd.s32 %v97, %v103
    %v105 = vadd.s32 %v98, %v102
    %vm106 = vcmask 1041408
    %v107 = vrot.slane %v104, 6
    %v108 = vrot.slane %v105, 6
    %v109 = vsel %vm106, %v107, %v108
    %v110 = vsel %vm106, 0, %v107
    %v111 = vadd.s32 %v104, %v110
    %v112 = vadd.s32 %v105, %v109
    %vm113 = vcmask 1043456
    %v114 = vrot.slane %v111, 4
    %v115 = vrot.slane %v112, 4
    %v116 = vsel %vm113, %v114, %v115
    %v117 = vsel %vm113, 0, %v114
    %v118 = vadd.s32 %v111, %v117
    %v119 = vadd.s32 %v112, %v116
    %v120 = vadd.s32 %v119, %v118
    %v121 = vsub.s32 %v118, %v97
    %v122 = vsub.s32 %v120, %v98
    %123 = vst [vmem:[#allocation9] sm:$0xff] 0.0
    %124 = vst [vmem:[#allocation9 + $0x8] sm:$0xf] 0.0
    // While loop
    $region25: #{tpu_custom_call.1} parent=1 // loop_pre_header
      _
    $region26: #{tpu_custom_call.1} parent=1 // loop_header
      %s126 = sphi 0, %s128
      %p127 = scmp.ge.s32.totalorder %s126, %s34
    $region27: #{tpu_custom_call.1} parent=1 // loop_header_branch
      %130 = sbr.rel (%p127) target = $region31
    $region28: #{tpu_custom_call.1} parent=1 // loop_body
      %v131 = vstv %s126
      %vm132 = vcmp.eq.s32.totalorder %v121, %v131
      %vm133 = vcmp.eq.s32.totalorder %v122, %v131
      %vm134 = vmand %vm95, %vm132
      %vm135 = vmand %vm96, %vm133
      %v136 = vsel %vm134, %v35, 0.0
      %v137 = vsel %vm135, %v36, 0.0
      %v138 = vadd.f32 %v136, %v137
      %v139 = vrot.slane %v138, 4
      %v140 = vadd.f32 %v138, %v139
      %v141 = vrot.slane %v140, 2
      %v142 = vadd.f32 %v140, %v141
      %v143 = vrot.slane %v142, 1
      %v144 = vadd.f32 %v142, %v143
      %s145 = scalar_lea.vmem [#allocation9], %s126
      %146 = vst [vmem:[%s145] sm:$0x1] %v144
    $region29: #{tpu_custom_call.1} parent=1 // loop_footer
      %s128 = sadd.s32 %s126, 1
    $region30: #{tpu_custom_call.1} parent=1 // loop_footer_branch
      %125 = sbr.rel target = $region26
    $region31: #{tpu_custom_call.1} parent=1 // loop_exit
      _
    // Predicated region
    $region32: #{tpu_custom_call.1} parent=1 // pred_check
      _
    $region33: #{tpu_custom_call.1} parent=1 // pred_check_branch
      %148 = sbr.rel (0) target = $region35
    $region34: #{tpu_custom_call.1} parent=1 // pred_region
      %s150 = ssub.s32 256, 256
      %151 = vsyncadd [#allocation8], %s150
      %s152 = sshll.u32 [#allocation9], 4
      %s153 = int_to_ptr.vmem [resolvable:$true] %s152
      %158 = dma.vmem_to_hbm [thread:$0]  %s153, 256, %s5, [#allocation8], 128, 128, 8
    $region35: #{tpu_custom_call.1} parent=1 // pred_fallthru
      _
    // Predicated region
    $region36: #{tpu_custom_call.1} parent=1 // pred_check
      _
    $region37: #{tpu_custom_call.1} parent=1 // pred_check_branch
      %160 = sbr.rel (0) target = $region39
    $region38: #{tpu_custom_call.1} parent=1 // pred_region
      %161 = dma.done [#allocation8], 256
    $region39: #{tpu_custom_call.1} parent=1 // pred_fallthru
      _
    %162 = vsyncpa [#allocation7], 1
    %163 = vsyncpa [#allocation8], 1

</llo_original>
